<compile_context>
chip_gen: v7x
topology: tpu7x:2x2x1
jax: 0.10.0
libtpu: 0.0.40
codegen_flags: <defaults>
</compile_context>

<pallas_src>
import functools

import jax
import jax.numpy as jnp
from jax.experimental import pallas as pl
from jax.experimental.pallas import tpu as pltpu


def _round_up(n, m):
    return ((n + m - 1) // m) * m


def dqn_kernel(x_ref, w1_ref, b1_ref, w2_ref, b2_ref, w3_ref, b3_ref, o_ref):
    # Layer 1: Linear(state_dim, 128) + ReLU   (bf16 operands, f32 accumulate)
    x = x_ref[...].astype(jnp.bfloat16)                               # (tb, S)
    h1 = jnp.dot(x, w1_ref[...], preferred_element_type=jnp.float32)  # (tb, 128)
    h1 = jnp.maximum(h1 + b1_ref[...], 0.0)
    # Layer 2: Linear(128, 64) + ReLU
    h2 = jnp.dot(h1.astype(jnp.bfloat16), w2_ref[...],
                 preferred_element_type=jnp.float32)                  # (tb, 64)
    h2 = jnp.maximum(h2 + b2_ref[...], 0.0)
    # Layer 3: Linear(64, action_dim), no activation
    out = jnp.dot(h2.astype(jnp.bfloat16), w3_ref[...],
                  preferred_element_type=jnp.float32)                 # (tb, A)
    o_ref[...] = out + b3_ref[...]


def prepare_params(params):
    """Weights -> bf16 (MXU operands), biases -> f32 row vectors. No padding."""
    w1, b1, w2, b2, w3, b3 = params
    state_dim = w1.shape[0]
    action_dim = w3.shape[1]
    prepared = (
        w1.astype(jnp.bfloat16), b1.reshape(1, -1).astype(jnp.float32),
        w2.astype(jnp.bfloat16), b2.reshape(1, -1).astype(jnp.float32),
        w3.astype(jnp.bfloat16), b3.reshape(1, -1).astype(jnp.float32),
    )
    return prepared, (state_dim, action_dim)


@functools.partial(jax.jit, static_argnames=("tb",))
def _dqn_forward_padded(x_pad, prepared, tb):
    """x_pad: (B_pad, state_dim) f32, B_pad % tb == 0. Returns (B_pad, action_dim) f32."""
    w1, b1, w2, b2, w3, b3 = prepared
    b_pad, state_dim = x_pad.shape
    action_dim = w3.shape[1]
    grid = (b_pad // tb,)

    resident = lambda shape: pl.BlockSpec(shape, lambda i: (0, 0))  # stays in VMEM
    return pl.pallas_call(
        dqn_kernel,
        out_shape=jax.ShapeDtypeStruct((b_pad, action_dim), jnp.float32),
        grid=grid,
        in_specs=[
            pl.BlockSpec((tb, state_dim), lambda i: (i, 0)),   # x tile (pipelined)
            resident(w1.shape), resident(b1.shape),            # weights/biases resident
            resident(w2.shape), resident(b2.shape),
            resident(w3.shape), resident(b3.shape),
        ],
        out_specs=pl.BlockSpec((tb, action_dim), lambda i: (i, 0)),
        compiler_params=pltpu.CompilerParams(
            dimension_semantics=("parallel",),
        ),
    )(x_pad, w1, b1, w2, b2, w3, b3)


def dqn_forward(x, prepared, dims, tb=512):
    """x: (batch, state_dim) f32. Returns (batch, action_dim) f32 Q-values."""
    _, action_dim = dims
    batch = x.shape[0]

    # Batch tile: at most `tb`, at least an 8-sublane multiple covering the batch.
    tb_eff = min(tb, _round_up(batch, 8))
    b_pad = _round_up(batch, tb_eff)
    x_pad = x if b_pad == batch else jnp.pad(x, ((0, b_pad - batch), (0, 0)))

    out = _dqn_forward_padded(x_pad, prepared, tb_eff)
    return out[:batch, :action_dim]


def init_params(key, state_dim, action_dim):
    """Deterministic init mirroring nn.Linear default (U(-1/sqrt(fan_in), 1/sqrt(fan_in)))."""
    dims = [(state_dim, 128), (128, 64), (64, action_dim)]
    params = []
    for fan_in, fan_out in dims:
        key, kw, kb = jax.random.split(key, 3)
        bound = 1.0 / jnp.sqrt(float(fan_in))
        w = jax.random.uniform(kw, (fan_in, fan_out), jnp.float32, -bound, bound)
        b = jax.random.uniform(kb, (1, fan_out), jnp.float32, -bound, bound)
        params.extend([w, b])
    return tuple(params)


def reference_forward_bf16(x, params):
    """Pure-JAX reference mirroring the kernel's numerics (bf16 operands, f32 accumulate)."""
    w1, b1, w2, b2, w3, b3 = params

    def lin(h, w, b):
        return jnp.dot(h.astype(jnp.bfloat16), w.astype(jnp.bfloat16),
                       preferred_element_type=jnp.float32) + b

    h1 = jnp.maximum(lin(x, w1, b1), 0.0)
    h2 = jnp.maximum(lin(h1, w2, b2), 0.0)
    return lin(h2, w3, b3)


def reference_forward_f32(x, params):
    w1, b1, w2, b2, w3, b3 = params
    h1 = jnp.maximum(x @ w1 + b1, 0.0)
    h2 = jnp.maximum(h1 @ w2 + b2, 0.0)
    return h2 @ w3 + b3


if __name__ == "__main__":
    state_dim = 8     # LunarLander observation dim
    action_dim = 4    # LunarLander action dim
    batch = 200       # small demo batch; exercises grid (4 tiles of 64) + batch padding

    key = jax.random.PRNGKey(0)
    key, kx = jax.random.split(key)
    x = jax.random.normal(kx, (batch, state_dim), jnp.float32)
    params = init_params(key, state_dim, action_dim)

    prepared, dims = prepare_params(params)
    out = dqn_forward(x, prepared, dims, tb=64)
    out = jax.block_until_ready(out)

    assert out.shape == (batch, action_dim)

    ref_bf16 = reference_forward_bf16(x, params)
    ref_f32 = reference_forward_f32(x, params)
    assert jnp.allclose(out, ref_bf16, atol=2e-3, rtol=2e-3), "mismatch vs bf16 reference"
    assert jnp.allclose(out, ref_f32, atol=5e-2, rtol=5e-2), "mismatch vs f32 reference"

    print("KERNEL_OK")
</pallas_src>

<mosaic_0001>
module attributes {stable_mosaic.version = 11 : i64} {
  func.func @dqn_kernel(%arg0: i32, %arg1: memref<64x8xf32, #tpu.memory_space<vmem>>, %arg2: memref<8x128xbf16, #tpu.memory_space<vmem>>, %arg3: memref<1x128xf32, #tpu.memory_space<vmem>>, %arg4: memref<128x64xbf16, #tpu.memory_space<vmem>>, %arg5: memref<1x64xf32, #tpu.memory_space<vmem>>, %arg6: memref<64x4xbf16, #tpu.memory_space<vmem>>, %arg7: memref<1x4xf32, #tpu.memory_space<vmem>>, %arg8: memref<64x4xf32, #tpu.memory_space<vmem>>) attributes {dimension_semantics = [#tpu.dimension_semantics<parallel>], iteration_bounds = array<i64: 4>, scalar_prefetch = 0 : i64, scratch_operands = 0 : i64, tpu.core_type = #tpu.core_type<tc>, window_params = [{transform_indices = @transform_0, window_bounds = array<i64: 64, 8>}, {pipeline_mode = #tpu.pipeline_mode<synchronous>, transform_indices = @transform_1, window_bounds = array<i64: 8, 128>}, {pipeline_mode = #tpu.pipeline_mode<synchronous>, transform_indices = @transform_2, window_bounds = array<i64: 1, 128>}, {pipeline_mode = #tpu.pipeline_mode<synchronous>, transform_indices = @transform_3, window_bounds = array<i64: 128, 64>}, {pipeline_mode = #tpu.pipeline_mode<synchronous>, transform_indices = @transform_4, window_bounds = array<i64: 1, 64>}, {pipeline_mode = #tpu.pipeline_mode<synchronous>, transform_indices = @transform_5, window_bounds = array<i64: 64, 4>}, {pipeline_mode = #tpu.pipeline_mode<synchronous>, transform_indices = @transform_6, window_bounds = array<i64: 1, 4>}, {transform_indices = @transform_7, window_bounds = array<i64: 64, 4>}]} {
    %c0 = arith.constant 0 : index
    %c0_0 = arith.constant 0 : index
    %0 = vector.load %arg1[%c0, %c0_0] : memref<64x8xf32, #tpu.memory_space<vmem>>, vector<64x8xf32>
    %1 = arith.truncf %0 : vector<64x8xf32> to vector<64x8xbf16>
    %c0_1 = arith.constant 0 : index
    %c0_2 = arith.constant 0 : index
    %2 = vector.load %arg2[%c0_1, %c0_2] : memref<8x128xbf16, #tpu.memory_space<vmem>>, vector<8x128xbf16>
    %cst = arith.constant dense<0.000000e+00> : vector<64x128xf32>
    %3 = tpu.matmul %1, %2, %cst {dimension_numbers = #tpu.dot_dimension_numbers<[1], [0], [0], [1], [0, 0, 1, 1], [], []>} : vector<64x8xbf16>, vector<8x128xbf16>, vector<64x128xf32> -> vector<64x128xf32>
    %c0_3 = arith.constant 0 : index
    %c0_4 = arith.constant 0 : index
    %4 = vector.load %arg3[%c0_3, %c0_4] : memref<1x128xf32, #tpu.memory_space<vmem>>, vector<1x128xf32>
    %5 = vector.broadcast %4 : vector<1x128xf32> to vector<64x128xf32>
    %6 = arith.addf %3, %5 : vector<64x128xf32>
    %cst_5 = arith.constant 0.000000e+00 : f32
    %7 = vector.broadcast %cst_5 : f32 to vector<64x128xf32>
    %8 = arith.maximumf %6, %7 : vector<64x128xf32>
    %9 = arith.truncf %8 : vector<64x128xf32> to vector<64x128xbf16>
    %c0_6 = arith.constant 0 : index
    %c0_7 = arith.constant 0 : index
    %10 = vector.load %arg4[%c0_6, %c0_7] : memref<128x64xbf16, #tpu.memory_space<vmem>>, vector<128x64xbf16>
    %cst_8 = arith.constant dense<0.000000e+00> : vector<64x64xf32>
    %11 = tpu.matmul %9, %10, %cst_8 {dimension_numbers = #tpu.dot_dimension_numbers<[1], [0], [0], [1], [0, 0, 1, 1], [], []>} : vector<64x128xbf16>, vector<128x64xbf16>, vector<64x64xf32> -> vector<64x64xf32>
    %c0_9 = arith.constant 0 : index
    %c0_10 = arith.constant 0 : index
    %12 = vector.load %arg5[%c0_9, %c0_10] : memref<1x64xf32, #tpu.memory_space<vmem>>, vector<1x64xf32>
    %13 = vector.broadcast %12 : vector<1x64xf32> to vector<64x64xf32>
    %14 = arith.addf %11, %13 : vector<64x64xf32>
    %cst_11 = arith.constant 0.000000e+00 : f32
    %15 = vector.broadcast %cst_11 : f32 to vector<64x64xf32>
    %16 = arith.maximumf %14, %15 : vector<64x64xf32>
    %17 = arith.truncf %16 : vector<64x64xf32> to vector<64x64xbf16>
    %c0_12 = arith.constant 0 : index
    %c0_13 = arith.constant 0 : index
    %18 = vector.load %arg6[%c0_12, %c0_13] : memref<64x4xbf16, #tpu.memory_space<vmem>>, vector<64x4xbf16>
    %cst_14 = arith.constant dense<0.000000e+00> : vector<64x4xf32>
    %19 = tpu.matmul %17, %18, %cst_14 {dimension_numbers = #tpu.dot_dimension_numbers<[1], [0], [0], [1], [0, 0, 1, 1], [], []>} : vector<64x64xbf16>, vector<64x4xbf16>, vector<64x4xf32> -> vector<64x4xf32>
    %c0_15 = arith.constant 0 : index
    %c0_16 = arith.constant 0 : index
    %20 = vector.load %arg7[%c0_15, %c0_16] : memref<1x4xf32, #tpu.memory_space<vmem>>, vector<1x4xf32>
    %21 = vector.broadcast %20 : vector<1x4xf32> to vector<64x4xf32>
    %22 = arith.addf %19, %21 : vector<64x4xf32>
    %c0_17 = arith.constant 0 : index
    %c0_18 = arith.constant 0 : index
    %23 = vector.load %arg8[%c0_17, %c0_18] : memref<64x4xf32, #tpu.memory_space<vmem>>, vector<64x4xf32>
    tpu.vector_store %arg8[%c0_17, %c0_18], %22 {strides = array<i32>} : memref<64x4xf32, #tpu.memory_space<vmem>>, vector<64x4xf32>,
    return
  }
  func.func @transform_0(%arg0: i32) -> (i32, i32) {
    %c0_i32 = arith.constant 0 : i32
    %c0_i32_0 = arith.constant 0 : i32
    return %arg0, %c0_i32 : i32, i32
  }
  func.func @transform_1(%arg0: i32) -> (i32, i32) {
    %c0_i32 = arith.constant 0 : i32
    %c0_i32_0 = arith.constant 0 : i32
    %c0_i32_1 = arith.constant 0 : i32
    return %c0_i32, %c0_i32_0 : i32, i32
  }
  func.func @transform_2(%arg0: i32) -> (i32, i32) {
    %c0_i32 = arith.constant 0 : i32
    %c0_i32_0 = arith.constant 0 : i32
    %c0_i32_1 = arith.constant 0 : i32
    return %c0_i32, %c0_i32_0 : i32, i32
  }
  func.func @transform_3(%arg0: i32) -> (i32, i32) {
    %c0_i32 = arith.constant 0 : i32
    %c0_i32_0 = arith.constant 0 : i32
    %c0_i32_1 = arith.constant 0 : i32
    return %c0_i32, %c0_i32_0 : i32, i32
  }
  func.func @transform_4(%arg0: i32) -> (i32, i32) {
    %c0_i32 = arith.constant 0 : i32
    %c0_i32_0 = arith.constant 0 : i32
    %c0_i32_1 = arith.constant 0 : i32
    return %c0_i32, %c0_i32_0 : i32, i32
  }
  func.func @transform_5(%arg0: i32) -> (i32, i32) {
    %c0_i32 = arith.constant 0 : i32
    %c0_i32_0 = arith.constant 0 : i32
    %c0_i32_1 = arith.constant 0 : i32
    return %c0_i32, %c0_i32_0 : i32, i32
  }
  func.func @transform_6(%arg0: i32) -> (i32, i32) {
    %c0_i32 = arith.constant 0 : i32
    %c0_i32_0 = arith.constant 0 : i32
    %c0_i32_1 = arith.constant 0 : i32
    return %c0_i32, %c0_i32_0 : i32, i32
  }
  func.func @transform_7(%arg0: i32) -> (i32, i32) {
    %c0_i32 = arith.constant 0 : i32
    %c0_i32_0 = arith.constant 0 : i32
    return %arg0, %c0_i32 : i32, i32
  }
}

</mosaic_0001>

<llo_original>
// kernel: _dqn_forward_padded.1
$region0: #{_dqn_forward_padded.1}
  #allocation0 [shape = 'u32[]', space=smem, size = 0x4, offset = 0x4, fixed_abs, tag = 'smem constant byte address 0x4 - core index']
  #allocation1 [shape = 'u32[144,128]{1,0:T(1,128)}', space=vmem, size = 0x12000, scoped, tag = 'internal scratch']
  %s0 = inlined_call_operand.vmem [shape: f32[256,8], index: 0, kind: input, shape index: {}]
  %s1 = inlined_call_operand.vmem [shape: bf16[8,128], index: 1, kind: input, shape index: {}]
  %s2 = inlined_call_operand.vmem [shape: f32[1,128], index: 2, kind: input, shape index: {}]
  %s3 = inlined_call_operand.vmem [shape: bf16[128,64], index: 3, kind: input, shape index: {}]
  %s4 = inlined_call_operand.vmem [shape: f32[1,64], index: 4, kind: input, shape index: {}]
  %s5 = inlined_call_operand.vmem [shape: bf16[64,4], index: 5, kind: input, shape index: {}]
  %s6 = inlined_call_operand.vmem [shape: f32[1,4], index: 6, kind: input, shape index: {}]
  %s7 = inlined_call_operand.vmem [shape: f32[256,4], index: 7, kind: output, shape index: {}]
  %s8 = sld [smem:[#allocation0]]
  $region61: #{_dqn_forward_padded.1} parent=0
    _
  %s10 = ssub.s32 1, %s8
  %s11 = scalar_select 0, %s10, %s8
  loop: start=0, step=1, limit=6
  $region2: #{_dqn_forward_padded.1} parent=0 // loop_pre_header
    _
  $region3: #{_dqn_forward_padded.1} parent=0 // loop_header
    %s13 = sphi 0, %s17
    %p14 = scmp.ge.s32.totalorder %s13, 6
    %s23 = sphi 0, %s25
    %s26 = sphi 0, %s23
    %s27 = sphi 0, %s26
    %s43 = sphi 0, %s27
    %s47 = sphi 0, %s47
    %s49 = sphi 0, %s47
    %s50 = sphi 0, %s49
    %s64 = sphi 0, %s50
    %s68 = sphi 0, %s68
    %s70 = sphi 0, %s68
    %s71 = sphi 0, %s70
    %s85 = sphi 0, %s71
    %s89 = sphi 0, %s89
    %s91 = sphi 0, %s89
    %s92 = sphi 0, %s91
    %s106 = sphi 0, %s92
    %s110 = sphi 0, %s110
    %s112 = sphi 0, %s110
    %s113 = sphi 0, %s112
    %s127 = sphi 0, %s113
    %s131 = sphi 0, %s131
    %s133 = sphi 0, %s131
    %s134 = sphi 0, %s133
    %s148 = sphi 0, %s134
    %s152 = sphi 0, %s152
    %s154 = sphi 0, %s152
    %s155 = sphi 0, %s154
    %s169 = sphi 0, %s155
    %s175 = sphi 0, %s177
    %s178 = sphi 0, %s175
    %s179 = sphi 0, %s178
    %s195 = sphi 0, %s179
  $region4: #{_dqn_forward_padded.1} parent=0 // loop_header_branch
    %16 = sbr.rel (%p14) target = $region8
  $region5: #{_dqn_forward_padded.1} parent=0 // loop_body
    %s18 = ssub.s32 %s13, 1
    %s19 = ssub.s32 %s13, 2
    %s20 = sadd.s32 %s13, 1
    %s21 = ssub.s32 %s13, %s20
    %p22 = scmp.eq.s32.totalorder %s21, 0
    %s24 = sadd.s32 %s23, 1
    %s25 = scalar_select %p22, %s23, %s24
    %p28 = pneg %p22
    %p29 = scmp.eq.s32.totalorder %s13, 3
    %p30 = por %p28, %p29
    %p31 = scmp.ne.s32.totalorder %s23, %s26
    %p32 = scmp.eq.s32.totalorder %s13, 0
    %p33 = por %p31, %p32
    %p34 = scmp.ne.s32.totalorder %s23, %s26
    %p35 = scmp.eq.s32.totalorder %s18, 3
    %p36 = por %p34, %p35
    %p37 = scmp.ne.s32.totalorder %s26, %s27
    %p38 = scmp.eq.s32.totalorder %s18, 0
    %p39 = por %p37, %p38
    %p40 = scmp.ne.s32.totalorder %s26, %s27
    %p41 = scmp.eq.s32.totalorder %s19, 3
    %p42 = por %p40, %p41
    %p44 = scmp.ne.s32.totalorder %s27, %s43
    %p45 = scmp.eq.s32.totalorder %s19, 0
    %p46 = por %p44, %p45
    %s48 = sadd.s32 %s47, 1
    %p51 = scmp.eq.s32.totalorder %s13, 3
    %p52 = scmp.ne.s32.totalorder %s47, %s49
    %p53 = scmp.eq.s32.totalorder %s13, 0
    %p54 = por %p52, %p53
    %p55 = scmp.ne.s32.totalorder %s47, %s49
    %p56 = scmp.eq.s32.totalorder %s18, 3
    %p57 = por %p55, %p56
    %p58 = scmp.ne.s32.totalorder %s49, %s50
    %p59 = scmp.eq.s32.totalorder %s18, 0
    %p60 = por %p58, %p59
    %p61 = scmp.ne.s32.totalorder %s49, %s50
    %p62 = scmp.eq.s32.totalorder %s19, 3
    %p63 = por %p61, %p62
    %p65 = scmp.ne.s32.totalorder %s50, %s64
    %p66 = scmp.eq.s32.totalorder %s19, 0
    %p67 = por %p65, %p66
    %s69 = sadd.s32 %s68, 1
    %p72 = scmp.eq.s32.totalorder %s13, 3
    %p73 = scmp.ne.s32.totalorder %s68, %s70
    %p74 = scmp.eq.s32.totalorder %s13, 0
    %p75 = por %p73, %p74
    %p76 = scmp.ne.s32.totalorder %s68, %s70
    %p77 = scmp.eq.s32.totalorder %s18, 3
    %p78 = por %p76, %p77
    %p79 = scmp.ne.s32.totalorder %s70, %s71
    %p80 = scmp.eq.s32.totalorder %s18, 0
    %p81 = por %p79, %p80
    %p82 = scmp.ne.s32.totalorder %s70, %s71
    %p83 = scmp.eq.s32.totalorder %s19, 3
    %p84 = por %p82, %p83
    %p86 = scmp.ne.s32.totalorder %s71, %s85
    %p87 = scmp.eq.s32.totalorder %s19, 0
    %p88 = por %p86, %p87
    %s90 = sadd.s32 %s89, 1
    %p93 = scmp.eq.s32.totalorder %s13, 3
    %p94 = scmp.ne.s32.totalorder %s89, %s91
    %p95 = scmp.eq.s32.totalorder %s13, 0
    %p96 = por %p94, %p95
    %p97 = scmp.ne.s32.totalorder %s89, %s91
    %p98 = scmp.eq.s32.totalorder %s18, 3
    %p99 = por %p97, %p98
    %p100 = scmp.ne.s32.totalorder %s91, %s92
    %p101 = scmp.eq.s32.totalorder %s18, 0
    %p102 = por %p100, %p101
    %p103 = scmp.ne.s32.totalorder %s91, %s92
    %p104 = scmp.eq.s32.totalorder %s19, 3
    %p105 = por %p103, %p104
    %p107 = scmp.ne.s32.totalorder %s92, %s106
    %p108 = scmp.eq.s32.totalorder %s19, 0
    %p109 = por %p107, %p108
    %s111 = sadd.s32 %s110, 1
    %p114 = scmp.eq.s32.totalorder %s13, 3
    %p115 = scmp.ne.s32.totalorder %s110, %s112
    %p116 = scmp.eq.s32.totalorder %s13, 0
    %p117 = por %p115, %p116
    %p118 = scmp.ne.s32.totalorder %s110, %s112
    %p119 = scmp.eq.s32.totalorder %s18, 3
    %p120 = por %p118, %p119
    %p121 = scmp.ne.s32.totalorder %s112, %s113
    %p122 = scmp.eq.s32.totalorder %s18, 0
    %p123 = por %p121, %p122
    %p124 = scmp.ne.s32.totalorder %s112, %s113
    %p125 = scmp.eq.s32.totalorder %s19, 3
    %p126 = por %p124, %p125
    %p128 = scmp.ne.s32.totalorder %s113, %s127
    %p129 = scmp.eq.s32.totalorder %s19, 0
    %p130 = por %p128, %p129
    %s132 = sadd.s32 %s131, 1
    %p135 = scmp.eq.s32.totalorder %s13, 3
    %p136 = scmp.ne.s32.totalorder %s131, %s133
    %p137 = scmp.eq.s32.totalorder %s13, 0
    %p138 = por %p136, %p137
    %p139 = scmp.ne.s32.totalorder %s131, %s133
    %p140 = scmp.eq.s32.totalorder %s18, 3
    %p141 = por %p139, %p140
    %p142 = scmp.ne.s32.totalorder %s133, %s134
    %p143 = scmp.eq.s32.totalorder %s18, 0
    %p144 = por %p142, %p143
    %p145 = scmp.ne.s32.totalorder %s133, %s134
    %p146 = scmp.eq.s32.totalorder %s19, 3
    %p147 = por %p145, %p146
    %p149 = scmp.ne.s32.totalorder %s134, %s148
    %p150 = scmp.eq.s32.totalorder %s19, 0
    %p151 = por %p149, %p150
    %s153 = sadd.s32 %s152, 1
    %p156 = scmp.eq.s32.totalorder %s13, 3
    %p157 = scmp.ne.s32.totalorder %s152, %s154
    %p158 = scmp.eq.s32.totalorder %s13, 0
    %p159 = por %p157, %p158
    %p160 = scmp.ne.s32.totalorder %s152, %s154
    %p161 = scmp.eq.s32.totalorder %s18, 3
    %p162 = por %p160, %p161
    %p163 = scmp.ne.s32.totalorder %s154, %s155
    %p164 = scmp.eq.s32.totalorder %s18, 0
    %p165 = por %p163, %p164
    %p166 = scmp.ne.s32.totalorder %s154, %s155
    %p167 = scmp.eq.s32.totalorder %s19, 3
    %p168 = por %p166, %p167
    %p170 = scmp.ne.s32.totalorder %s155, %s169
    %p171 = scmp.eq.s32.totalorder %s19, 0
    %p172 = por %p170, %p171
    %s173 = ssub.s32 %s13, %s20
    %p174 = scmp.eq.s32.totalorder %s173, 0
    %s176 = sadd.s32 %s175, 1
    %s177 = scalar_select %p174, %s175, %s176
    %p180 = pneg %p174
    %p181 = scmp.eq.s32.totalorder %s13, 3
    %p182 = por %p180, %p181
    %p183 = scmp.ne.s32.totalorder %s175, %s178
    %p184 = scmp.eq.s32.totalorder %s13, 0
    %p185 = por %p183, %p184
    %p186 = scmp.ne.s32.totalorder %s175, %s178
    %p187 = scmp.eq.s32.totalorder %s18, 3
    %p188 = por %p186, %p187
    %p189 = scmp.ne.s32.totalorder %s178, %s179
    %p190 = scmp.eq.s32.totalorder %s18, 0
    %p191 = por %p189, %p190
    %p192 = scmp.ne.s32.totalorder %s178, %s179
    %p193 = scmp.eq.s32.totalorder %s19, 3
    %p194 = por %p192, %p193
    %p196 = scmp.ne.s32.totalorder %s179, %s195
    %p197 = scmp.eq.s32.totalorder %s19, 0
    %p198 = por %p196, %p197
    %p199 = scmp.le.s32.totalorder 1, %s13
    %p200 = scmp.lt.s32.totalorder %s13, 5
    %p201 = pnand %p199, %p200
    %p202 = pneg %p201
    // Predicated region
    $region9: #{_dqn_forward_padded.1} parent=5 // pred_check
      _
    $region10: #{_dqn_forward_padded.1} parent=5 // pred_check_branch
      %204 = sbr.rel (%p201) target = $region12
    $region11: #{_dqn_forward_padded.1} parent=5 // pred_region
      %s205 = ssub.s32 %s13, 1
      // Predicated region
      $region13: #{_dqn_forward_padded.1} parent=11 // pred_check
        %p206 = pneg %p60
      $region14: #{_dqn_forward_padded.1} parent=11 // pred_check_branch
        %208 = sbr.rel (%p206) target = $region16
      $region15: #{_dqn_forward_padded.1} parent=11 // pred_region
        _
      $region16: #{_dqn_forward_padded.1} parent=11 // pred_fallthru
        _
      // Predicated region
      $region17: #{_dqn_forward_padded.1} parent=11 // pred_check
        %p209 = pneg %p81
      $region18: #{_dqn_forward_padded.1} parent=11 // pred_check_branch
        %211 = sbr.rel (%p209) target = $region20
      $region19: #{_dqn_forward_padded.1} parent=11 // pred_region
        _
      $region20: #{_dqn_forward_padded.1} parent=11 // pred_fallthru
        _
      // Predicated region
      $region21: #{_dqn_forward_padded.1} parent=11 // pred_check
        %p212 = pneg %p102
      $region22: #{_dqn_forward_padded.1} parent=11 // pred_check_branch
        %214 = sbr.rel (%p212) target = $region24
      $region23: #{_dqn_forward_padded.1} parent=11 // pred_region
        _
      $region24: #{_dqn_forward_padded.1} parent=11 // pred_fallthru
        _
      // Predicated region
      $region25: #{_dqn_forward_padded.1} parent=11 // pred_check
        %p215 = pneg %p123
      $region26: #{_dqn_forward_padded.1} parent=11 // pred_check_branch
        %217 = sbr.rel (%p215) target = $region28
      $region27: #{_dqn_forward_padded.1} parent=11 // pred_region
        _
      $region28: #{_dqn_forward_padded.1} parent=11 // pred_fallthru
        _
      // Predicated region
      $region29: #{_dqn_forward_padded.1} parent=11 // pred_check
        %p218 = pneg %p144
      $region30: #{_dqn_forward_padded.1} parent=11 // pred_check_branch
        %220 = sbr.rel (%p218) target = $region32
      $region31: #{_dqn_forward_padded.1} parent=11 // pred_region
        _
      $region32: #{_dqn_forward_padded.1} parent=11 // pred_fallthru
        _
      // Predicated region
      $region33: #{_dqn_forward_padded.1} parent=11 // pred_check
        %p221 = pneg %p165
      $region34: #{_dqn_forward_padded.1} parent=11 // pred_check_branch
        %223 = sbr.rel (%p221) target = $region36
      $region35: #{_dqn_forward_padded.1} parent=11 // pred_region
        _
      $region36: #{_dqn_forward_padded.1} parent=11 // pred_fallthru
        _
    $region12: #{_dqn_forward_padded.1} parent=5 // pred_fallthru
      _
    %p224 = scmp.lt.s32.totalorder %s13, 4
    // Predicated region
    $region37: #{_dqn_forward_padded.1} parent=5 // pred_check
      %p225 = pneg %p224
    $region38: #{_dqn_forward_padded.1} parent=5 // pred_check_branch
      %227 = sbr.rel (%p225) target = $region40
    $region39: #{_dqn_forward_padded.1} parent=5 // pred_region
      // Predicated region
      $region41: #{_dqn_forward_padded.1} parent=39 // pred_check
        %p228 = pneg %p33
      $region42: #{_dqn_forward_padded.1} parent=39 // pred_check_branch
        %230 = sbr.rel (%p228) target = $region44
      $region43: #{_dqn_forward_padded.1} parent=39 // pred_region
        %s231 = smul.u32 8, %s13
        %p232 = scmp.lt.s32.totalorder %s231, 31
        %s233 = scalar_select %p232, %s231, 31
        %s234 = smul.addr %s233, 8
        %s235 = scalar_lea.vmem %s0, %s234
        %s236 = smul.u32 8, %s13
      $region44: #{_dqn_forward_padded.1} parent=39 // pred_fallthru
        _
    $region40: #{_dqn_forward_padded.1} parent=5 // pred_fallthru
      _
    %p237 = scmp.le.s32.totalorder 1, %s13
    %p238 = scmp.lt.s32.totalorder %s13, 5
    %p239 = pnand %p237, %p238
    %p240 = pneg %p239
    // Predicated region
    $region45: #{_dqn_forward_padded.1} parent=5 // pred_check
      _
    $region46: #{_dqn_forward_padded.1} parent=5 // pred_check_branch
      %242 = sbr.rel (%p239) target = $region48
    $region47: #{_dqn_forward_padded.1} parent=5 // pred_region
      %s243 = ssub.s32 %s13, 1
      %s244 = smul.u32 8, %s18
      %p245 = scmp.lt.s32.totalorder %s244, 31
      %s246 = scalar_select %p245, %s244, 31
      %s247 = smul.addr %s246, 8
      %s248 = scalar_lea.vmem %s0, %s247
      %p249 = pneg %p39
      %p250 = pneg %p36
      %p251 = pneg %p60
      %p252 = pneg %p57
      %p253 = pneg %p81
      %p254 = pneg %p78
      %p255 = pneg %p102
      %p256 = pneg %p99
      %p257 = pneg %p123
      %p258 = pneg %p120
      %p259 = pneg %p144
      %p260 = pneg %p141
      %p261 = pneg %p165
      %p262 = pneg %p162
      %p263 = pneg %p191
      %p264 = pneg %p188
      %s265 = smul.u32 8, %s18
      %p266 = scmp.lt.s32.totalorder %s265, 31
      %s267 = scalar_select %p266, %s265, 31
      %s268 = smul.addr %s267, 8
      %s269 = scalar_lea.vmem %s7, %s268
      %s270 = smul.u32 8, %s18
      %p271 = scmp.lt.s32.totalorder %s270, 31
      %s272 = scalar_select %p271, %s270, 31
      %s273 = smul.addr %s272, 8
      %s274 = scalar_lea.vmem %s0, %s273
      %s275 = smul.u32 8, %s18
      %s276 = smul.u32 8, %s18
      %p277 = scmp.lt.s32.totalorder %s276, 31
      %s278 = scalar_select %p277, %s276, 31
      %s279 = smul.addr %s278, 8
      %s280 = scalar_lea.vmem %s7, %s279
      %s281 = smul.u32 8, %s18
      %v283 = vld [vmem:[%s274] sm:$0xff]
      %v284 = vld [vmem:[%s274 + $0x8] sm:$0xff]
      %v285 = vld [vmem:[%s274 + $0x10] sm:$0xff]
      %v286 = vld [vmem:[%s274 + $0x18] sm:$0xff]
      %v287 = vld [vmem:[%s274 + $0x20] sm:$0xff]
      %v288 = vld [vmem:[%s274 + $0x28] sm:$0xff]
      %v289 = vld [vmem:[%s274 + $0x30] sm:$0xff]
      %v290 = vld [vmem:[%s274 + $0x38] sm:$0xff]
      %v291 = vpack.c.bf16 %v284, %v283
      %v292 = vpack.c.bf16 %v286, %v285
      %v293 = vpack.c.bf16 %v288, %v287
      %v294 = vpack.c.bf16 %v290, %v289
      %v295 = vld [vmem:[%s1] sm:$0xf]
      %v296 = vld [vmem:[%s2] sm:$0x1]
      %v298 = vlaneseq
      %v299 = vshrl.u32 %v298, 7
      %v300 = vsub.s32 0, %v299
      %v301 = vrot.slane %v296, %v300
      %vm303 = vcmask 64512
      %v305 = vsel %vm303, %v291, 0
      %v308 = vsel %vm303, %v292, 0
      %v311 = vsel %vm303, %v293, 0
      %v314 = vsel %vm303, %v294, 0
      %vm316 = vcmask 1043456
      %v318 = vsel %vm316, %v295, 0
      %320 = vmatprep.subr.bf16.mxu0 0
      %321 = vmatpush1.bf16.msra.mxu0 %v318
      %322 = vmatprep.subr.bf16.mxu0 0
      %323 = vmatpush1.bf16.msra.mxu0 0
      %324 = vmatprep.subr.bf16.mxu0 0
      %325 = vmatpush1.bf16.msra.mxu0 0
      %326 = vmatprep.subr.bf16.mxu0 0
      %327 = vmatpush1.bf16.msra.mxu0 0
      %328 = vmatprep.subr.bf16.mxu0 0
      %329 = vmatpush1.bf16.msra.mxu0 0
      %330 = vmatprep.subr.bf16.mxu0 0
      %331 = vmatpush1.bf16.msra.mxu0 0
      %332 = vmatprep.subr.bf16.mxu0 0
      %333 = vmatpush1.bf16.msra.mxu0 0
      %334 = vmatprep.subr.bf16.mxu0 0
      %335 = vmatpush1.bf16.msra.mxu0 0
      %336 = vmatprep.subr.bf16.mxu0 0
      %337 = vmatpush1.bf16.msra.mxu0 0
      %338 = vmatprep.subr.bf16.mxu0 0
      %339 = vmatpush1.bf16.msra.mxu0 0
      %340 = vmatprep.subr.bf16.mxu0 0
      %341 = vmatpush1.bf16.msra.mxu0 0
      %342 = vmatprep.subr.bf16.mxu0 0
      %343 = vmatpush1.bf16.msra.mxu0 0
      %344 = vmatprep.subr.bf16.mxu0 0
      %345 = vmatpush1.bf16.msra.mxu0 0
      %346 = vmatprep.subr.bf16.mxu0 0
      %347 = vmatpush1.bf16.msra.mxu0 0
      %348 = vmatprep.subr.bf16.mxu0 0
      %349 = vmatpush1.bf16.msra.mxu0 0
      %350 = vmatprep.subr.bf16.mxu0 0
      %351 = vmatpush1.bf16.msra.mxu0 0
      %352 = vmatprep.mubr.bf16.mxu0 0
      %353 = vmatmul.mubr.bf16.gmra.mrb[0].mxu0 %v305
      %v354 = vpop.f32.mrb[0].mxu0
      %v355 = vadd.f32 %v301, %v354
      %v356 = vpop.f32.mrb[0].mxu0
      %v357 = vpop.f32.mrb[0].mxu0
      %v358 = vadd.f32 %v301, %v357
      %v359 = vpop.f32.mrb[0].mxu0
      %360 = vmatprep.mubr.bf16.mxu0 0
      %361 = vmatmul.mubr.bf16.gmra.mrb[0].mxu0 %v308
      %v362 = vpop.f32.mrb[0].mxu0
      %v363 = vadd.f32 %v301, %v362
      %v364 = vpop.f32.mrb[0].mxu0
      %v365 = vpop.f32.mrb[0].mxu0
      %v366 = vadd.f32 %v301, %v365
      %v367 = vpop.f32.mrb[0].mxu0
      %368 = vmatprep.mubr.bf16.mxu0 0
      %369 = vmatmul.mubr.bf16.gmra.mrb[0].mxu0 %v311
      %v370 = vpop.f32.mrb[0].mxu0
      %v371 = vadd.f32 %v301, %v370
      %v372 = vpop.f32.mrb[0].mxu0
      %v373 = vpop.f32.mrb[0].mxu0
      %v374 = vadd.f32 %v301, %v373
      %v375 = vpop.f32.mrb[0].mxu0
      %376 = vmatprep.mubr.bf16.mxu0 0
      %377 = vmatmul.mubr.bf16.gmra.mrb[0].mxu0 %v314
      %v378 = vpop.f32.mrb[0].mxu0
      %v379 = vadd.f32 %v301, %v378
      %v380 = vpop.f32.mrb[0].mxu0
      %v381 = vpop.f32.mrb[0].mxu0
      %v382 = vadd.f32 %v301, %v381
      %v383 = vpop.f32.mrb[0].mxu0
      %384 = vdwg.mxu0
      %v385 = vmax.f32 %v355, 0.0
      %v386 = vmax.f32 %v358, 0.0
      %v387 = vmax.f32 %v363, 0.0
      %v388 = vmax.f32 %v366, 0.0
      %v389 = vmax.f32 %v371, 0.0
      %v390 = vmax.f32 %v374, 0.0
      %v391 = vmax.f32 %v379, 0.0
      %v392 = vmax.f32 %v382, 0.0
      %v393 = vpack.c.bf16 %v386, %v385
      %v394 = vpack.c.bf16 %v388, %v387
      %v395 = vpack.c.bf16 %v390, %v389
      %v396 = vpack.c.bf16 %v392, %v391
      %v397 = vld [vmem:[%s3] sm:$0xf]
      %v398 = vld [vmem:[%s3 + $0x4] sm:$0xf]
      %v399 = vld [vmem:[%s3 + $0x8] sm:$0xf]
      %v400 = vld [vmem:[%s3 + $0xc] sm:$0xf]
      %v401 = vld [vmem:[%s3 + $0x10] sm:$0xf]
      %v402 = vld [vmem:[%s3 + $0x14] sm:$0xf]
      %v403 = vld [vmem:[%s3 + $0x18] sm:$0xf]
      %v404 = vld [vmem:[%s3 + $0x1c] sm:$0xf]
      %v405 = vld [vmem:[%s3 + $0x20] sm:$0xf]
      %v406 = vld [vmem:[%s3 + $0x24] sm:$0xf]
      %v407 = vld [vmem:[%s3 + $0x28] sm:$0xf]
      %v408 = vld [vmem:[%s3 + $0x2c] sm:$0xf]
      %v409 = vld [vmem:[%s3 + $0x30] sm:$0xf]
      %v410 = vld [vmem:[%s3 + $0x34] sm:$0xf]
      %v411 = vld [vmem:[%s3 + $0x38] sm:$0xf]
      %v412 = vld [vmem:[%s3 + $0x3c] sm:$0xf]
      %v413 = vld [vmem:[%s4] sm:$0x1]
      %v415 = vlaneseq
      %v416 = vshrl.u32 %v415, 7
      %v417 = vsub.s32 0, %v416
      %v418 = vrot.slane %v413, %v417
      %v436 = vunpack.c.l.b16 %v397
      %v437 = vunpack.c.l.b16 %v398
      %v438 = vunpack.c.l.b16 %v399
      %v439 = vunpack.c.l.b16 %v400
      %v440 = vunpack.c.l.b16 %v401
      %v441 = vunpack.c.l.b16 %v402
      %v442 = vunpack.c.l.b16 %v403
      %v443 = vunpack.c.l.b16 %v404
      %v444 = vunpack.c.l.b16 %v405
      %v445 = vunpack.c.l.b16 %v406
      %v446 = vunpack.c.l.b16 %v407
      %v447 = vunpack.c.l.b16 %v408
      %v448 = vunpack.c.l.b16 %v409
      %v449 = vunpack.c.l.b16 %v410
      %v450 = vunpack.c.l.b16 %v411
      %v451 = vunpack.c.l.b16 %v412
      %v452 = vpack.c.b16 %v437, %v436
      %v453 = vpack.c.b16 %v439, %v438
      %v454 = vpack.c.b16 %v441, %v440
      %v455 = vpack.c.b16 %v443, %v442
      %v456 = vpack.c.b16 %v445, %v444
      %v457 = vpack.c.b16 %v447, %v446
      %v458 = vpack.c.b16 %v449, %v448
      %v459 = vpack.c.b16 %v451, %v450
      %468 = vmatprep.subr.bf16.mxu0 0
      %469 = vmatpush1.bf16.msra.mxu0 %v452
      %470 = vmatprep.subr.bf16.mxu0 0
      %471 = vmatpush1.bf16.msra.mxu0 %v453
      %472 = vmatprep.subr.bf16.mxu0 0
      %473 = vmatpush1.bf16.msra.mxu0 %v454
      %474 = vmatprep.subr.bf16.mxu0 0
      %475 = vmatpush1.bf16.msra.mxu0 %v455
      %476 = vmatprep.subr.bf16.mxu0 0
      %477 = vmatpush1.bf16.msra.mxu0 %v456
      %478 = vmatprep.subr.bf16.mxu0 0
      %479 = vmatpush1.bf16.msra.mxu0 %v457
      %480 = vmatprep.subr.bf16.mxu0 0
      %481 = vmatpush1.bf16.msra.mxu0 %v458
      %482 = vmatprep.subr.bf16.mxu0 0
      %483 = vmatpush1.bf16.msra.mxu0 %v459
      %484 = vmatprep.subr.bf16.mxu0 0
      %485 = vmatpush1.bf16.msra.mxu0 0
      %486 = vmatprep.subr.bf16.mxu0 0
      %487 = vmatpush1.bf16.msra.mxu0 0
      %488 = vmatprep.subr.bf16.mxu0 0
      %489 = vmatpush1.bf16.msra.mxu0 0
      %490 = vmatprep.subr.bf16.mxu0 0
      %491 = vmatpush1.bf16.msra.mxu0 0
      %492 = vmatprep.subr.bf16.mxu0 0
      %493 = vmatpush1.bf16.msra.mxu0 0
      %494 = vmatprep.subr.bf16.mxu0 0
      %495 = vmatpush1.bf16.msra.mxu0 0
      %496 = vmatprep.subr.bf16.mxu0 0
      %497 = vmatpush1.bf16.msra.mxu0 0
      %498 = vmatprep.subr.bf16.mxu0 0
      %499 = vmatpush1.bf16.msra.mxu0 0
      %500 = vmatprep.mubr.bf16.mxu0 0
      %501 = vmatmul.mubr.bf16.gmra.mrb[0].mxu0 %v393
      %v502 = vpop.f32.mrb[0].mxu0
      %v503 = vadd.f32 %v418, %v502
      %v504 = vpop.f32.mrb[0].mxu0
      %v505 = vpop.f32.mrb[0].mxu0
      %v506 = vadd.f32 %v418, %v505
      %v507 = vpop.f32.mrb[0].mxu0
      %508 = vmatprep.mubr.bf16.mxu0 0
      %509 = vmatmul.mubr.bf16.gmra.mrb[0].mxu0 %v394
      %v510 = vpop.f32.mrb[0].mxu0
      %v511 = vadd.f32 %v418, %v510
      %v512 = vpop.f32.mrb[0].mxu0
      %v513 = vpop.f32.mrb[0].mxu0
      %v514 = vadd.f32 %v418, %v513
      %v515 = vpop.f32.mrb[0].mxu0
      %516 = vmatprep.mubr.bf16.mxu0 0
      %517 = vmatmul.mubr.bf16.gmra.mrb[0].mxu0 %v395
      %v518 = vpop.f32.mrb[0].mxu0
      %v519 = vadd.f32 %v418, %v518
      %v520 = vpop.f32.mrb[0].mxu0
      %v521 = vpop.f32.mrb[0].mxu0
      %v522 = vadd.f32 %v418, %v521
      %v523 = vpop.f32.mrb[0].mxu0
      %524 = vmatprep.mubr.bf16.mxu0 0
      %525 = vmatmul.mubr.bf16.gmra.mrb[0].mxu0 %v396
      %v526 = vpop.f32.mrb[0].mxu0
      %v527 = vadd.f32 %v418, %v526
      %v528 = vpop.f32.mrb[0].mxu0
      %v529 = vpop.f32.mrb[0].mxu0
      %v530 = vadd.f32 %v418, %v529
      %v531 = vpop.f32.mrb[0].mxu0
      %532 = vdwg.mxu0
      %v533 = vmax.f32 %v503, 0.0
      %v534 = vmax.f32 %v506, 0.0
      %v535 = vmax.f32 %v511, 0.0
      %v536 = vmax.f32 %v514, 0.0
      %v537 = vmax.f32 %v519, 0.0
      %v538 = vmax.f32 %v522, 0.0
      %v539 = vmax.f32 %v527, 0.0
      %v540 = vmax.f32 %v530, 0.0
      %v541 = vpack.c.bf16 %v534, %v533
      %v542 = vpack.c.bf16 %v536, %v535
      %v543 = vpack.c.bf16 %v538, %v537
      %v544 = vpack.c.bf16 %v540, %v539
      %v545 = vld [vmem:[%s5] sm:$0xf]
      %v546 = vld [vmem:[%s5 + $0x4] sm:$0xf]
      %v547 = vld [vmem:[%s5 + $0x8] sm:$0xf]
      %v548 = vld [vmem:[%s5 + $0xc] sm:$0xf]
      %v549 = vld [vmem:[%s5 + $0x10] sm:$0xf]
      %v550 = vld [vmem:[%s5 + $0x14] sm:$0xf]
      %v551 = vld [vmem:[%s5 + $0x18] sm:$0xf]
      %v552 = vld [vmem:[%s5 + $0x1c] sm:$0xf]
      %v553 = vld [vmem:[%s6] sm:$0x1]
      %v555 = vlaneseq
      %v556 = vshrl.u32 %v555, 7
      %v557 = vsub.s32 0, %v556
      %v558 = vrot.slane %v553, %v557
      %v568 = vunpack.c.l.b16 %v545
      %v569 = vunpack.c.l.b16 %v546
      %v570 = vunpack.c.l.b16 %v547
      %v571 = vunpack.c.l.b16 %v548
      %v572 = vunpack.c.l.b16 %v549
      %v573 = vunpack.c.l.b16 %v550
      %v574 = vunpack.c.l.b16 %v551
      %v575 = vunpack.c.l.b16 %v552
      %v576 = vpack.c.b16 %v569, %v568
      %v577 = vpack.c.b16 %v571, %v570
      %v578 = vpack.c.b16 %v573, %v572
      %v579 = vpack.c.b16 %v575, %v574
      %vm584 = vcmask 523264
      %v586 = vsel %vm584, %v541, 0
      %v589 = vsel %vm584, %v542, 0
      %v592 = vsel %vm584, %v543, 0
      %v595 = vsel %vm584, %v544, 0
      %597 = vmatprep.subr.bf16.mxu0 0
      %598 = vmatpush1.bf16.msra.mxu0 %v576
      %599 = vmatprep.subr.bf16.mxu0 0
      %600 = vmatpush1.bf16.msra.mxu0 %v577
      %601 = vmatprep.subr.bf16.mxu0 0
      %602 = vmatpush1.bf16.msra.mxu0 %v578
      %603 = vmatprep.subr.bf16.mxu0 0
      %604 = vmatpush1.bf16.msra.mxu0 %v579
      %605 = vmatprep.subr.bf16.mxu0 0
      %606 = vmatpush1.bf16.msra.mxu0 0
      %607 = vmatprep.subr.bf16.mxu0 0
      %608 = vmatpush1.bf16.msra.mxu0 0
      %609 = vmatprep.subr.bf16.mxu0 0
      %610 = vmatpush1.bf16.msra.mxu0 0
      %611 = vmatprep.subr.bf16.mxu0 0
      %612 = vmatpush1.bf16.msra.mxu0 0
      %613 = vmatprep.subr.bf16.mxu0 0
      %614 = vmatpush1.bf16.msra.mxu0 0
      %615 = vmatprep.subr.bf16.mxu0 0
      %616 = vmatpush1.bf16.msra.mxu0 0
      %617 = vmatprep.subr.bf16.mxu0 0
      %618 = vmatpush1.bf16.msra.mxu0 0
      %619 = vmatprep.subr.bf16.mxu0 0
      %620 = vmatpush1.bf16.msra.mxu0 0
      %621 = vmatprep.subr.bf16.mxu0 0
      %622 = vmatpush1.bf16.msra.mxu0 0
      %623 = vmatprep.subr.bf16.mxu0 0
      %624 = vmatpush1.bf16.msra.mxu0 0
      %625 = vmatprep.subr.bf16.mxu0 0
      %626 = vmatpush1.bf16.msra.mxu0 0
      %627 = vmatprep.subr.bf16.mxu0 0
      %628 = vmatpush1.bf16.msra.mxu0 0
      %629 = vmatprep.mubr.bf16.mxu0 0
      %630 = vmatmul.mubr.bf16.gmra.mrb[0].mxu0 %v586
      %v631 = vpop.f32.mrb[0].mxu0
      %v632 = vadd.f32 %v558, %v631
      %v633 = vpop.f32.mrb[0].mxu0
      %v634 = vpop.f32.mrb[0].mxu0
      %v635 = vadd.f32 %v558, %v634
      %v636 = vpop.f32.mrb[0].mxu0
      %637 = vmatprep.mubr.bf16.mxu0 0
      %638 = vmatmul.mubr.bf16.gmra.mrb[0].mxu0 %v589
      %v639 = vpop.f32.mrb[0].mxu0
      %v640 = vadd.f32 %v558, %v639
      %v641 = vpop.f32.mrb[0].mxu0
      %v642 = vpop.f32.mrb[0].mxu0
      %v643 = vadd.f32 %v558, %v642
      %v644 = vpop.f32.mrb[0].mxu0
      %645 = vmatprep.mubr.bf16.mxu0 0
      %646 = vmatmul.mubr.bf16.gmra.mrb[0].mxu0 %v592
      %v647 = vpop.f32.mrb[0].mxu0
      %v648 = vadd.f32 %v558, %v647
      %v649 = vpop.f32.mrb[0].mxu0
      %v650 = vpop.f32.mrb[0].mxu0
      %v651 = vadd.f32 %v558, %v650
      %v652 = vpop.f32.mrb[0].mxu0
      %653 = vmatprep.mubr.bf16.mxu0 0
      %654 = vmatmul.mubr.bf16.gmra.mrb[0].mxu0 %v595
      %v655 = vpop.f32.mrb[0].mxu0
      %v656 = vadd.f32 %v558, %v655
      %v657 = vpop.f32.mrb[0].mxu0
      %v658 = vpop.f32.mrb[0].mxu0
      %v659 = vadd.f32 %v558, %v658
      %v660 = vpop.f32.mrb[0].mxu0
      %661 = vdwg.mxu0
      %vm662 = vcmask 31744
      %663 = vst.msk [vmem:[%s280] sm:$0xff] %vm662, %v632
      %664 = vst.msk [vmem:[%s280 + $0x8] sm:$0xff] %vm662, %v635
      %665 = vst.msk [vmem:[%s280 + $0x10] sm:$0xff] %vm662, %v640
      %666 = vst.msk [vmem:[%s280 + $0x18] sm:$0xff] %vm662, %v643
      %667 = vst.msk [vmem:[%s280 + $0x20] sm:$0xff] %vm662, %v648
      %668 = vst.msk [vmem:[%s280 + $0x28] sm:$0xff] %vm662, %v651
      %669 = vst.msk [vmem:[%s280 + $0x30] sm:$0xff] %vm662, %v656
      %670 = vst.msk [vmem:[%s280 + $0x38] sm:$0xff] %vm662, %v659
      %s671 = smul.u32 8, %s18
      %p672 = scmp.lt.s32.totalorder %s671, 31
      %s673 = scalar_select %p672, %s671, 31
      %s674 = smul.addr %s673, 8
      %s675 = scalar_lea.vmem %s7, %s674
      // Predicated region
      $region49: #{_dqn_forward_padded.1} parent=47 // pred_check
        %p676 = pneg %p188
      $region50: #{_dqn_forward_padded.1} parent=47 // pred_check_branch
        %678 = sbr.rel (%p676) target = $region52
      $region51: #{_dqn_forward_padded.1} parent=47 // pred_region
        %s679 = smul.u32 8, %s18
      $region52: #{_dqn_forward_padded.1} parent=47 // pred_fallthru
        _
    $region48: #{_dqn_forward_padded.1} parent=5 // pred_fallthru
      _
    %p680 = scmp.le.s32.totalorder 2, %s13
    // Predicated region
    $region53: #{_dqn_forward_padded.1} parent=5 // pred_check
      %p681 = pneg %p680
    $region54: #{_dqn_forward_padded.1} parent=5 // pred_check_branch
      %683 = sbr.rel (%p681) target = $region56
    $region55: #{_dqn_forward_padded.1} parent=5 // pred_region
      %s684 = ssub.s32 %s13, 2
      // Predicated region
      $region57: #{_dqn_forward_padded.1} parent=55 // pred_check
        %p685 = pneg %p194
      $region58: #{_dqn_forward_padded.1} parent=55 // pred_check_branch
        %687 = sbr.rel (%p685) target = $region60
      $region59: #{_dqn_forward_padded.1} parent=55 // pred_region
        %s688 = smul.u32 8, %s19
        %p689 = scmp.lt.s32.totalorder %s688, 31
        %s690 = scalar_select %p689, %s688, 31
        %s691 = smul.addr %s690, 8
        %s692 = scalar_lea.vmem %s7, %s691
      $region60: #{_dqn_forward_padded.1} parent=55 // pred_fallthru
        _
    $region56: #{_dqn_forward_padded.1} parent=5 // pred_fallthru
      _
  $region6: #{_dqn_forward_padded.1} parent=0 // loop_footer
    %s17 = sadd.s32 1, %s13
  $region7: #{_dqn_forward_padded.1} parent=0 // loop_footer_branch
    %12 = sbr.rel target = $region3
  $region8: #{_dqn_forward_padded.1} parent=0 // loop_exit
    _

</llo_original>
